<compile_context>
chip_gen: v5e
topology: v5e:2x2
jax: 0.10.0
libtpu: 0.0.40
codegen_flags: <defaults>
</compile_context>

<pallas_src>
import jax
import jax.numpy as jnp
import numpy as np
from jax.experimental import pallas as pl
from jax.experimental.pallas import tpu as pltpu


# ----------------------------------------------------------------------------
# Fused Pallas kernel: all TemporalBlocks + channel-select + time-mean.
# ----------------------------------------------------------------------------
def make_fused_tcn_kernel(layer_cfgs, N, T, n_masks):
    """layer_cfgs: list of dicts with keys: dilation, cout, has_ds, slot, mask_idx."""

    def kernel(*refs):
        refs = list(refs)
        x_ref = refs[0]                         # (NT, C0) f32 input activations
        mask_refs = refs[1:1 + n_masks]         # (NT, 1) f32 causal masks (per dilation)
        pool_ref = refs[1 + n_masks]            # (N, NT) f32 block-diag 1/T averaging
        pos = 2 + n_masks
        per_layer = []
        for cfg in layer_cfgs:
            n = 5 if cfg["has_ds"] else 4       # w1p, b1, w2p, b2, (bd)
            per_layer.append(refs[pos:pos + n])
            pos += n
        o_ref = refs[pos]                       # (N, 1) output

        # Hoist mask loads once; masks are reused by both convs of a layer.
        masks = [m[...] for m in mask_refs]

        h = x_ref[...]                          # (NT, C0) f32

        for cfg, lrefs in zip(layer_cfgs, per_layer):
            d, cout, slot = cfg["dilation"], cfg["cout"], cfg["slot"]
            mask = masks[cfg["mask_idx"]]
            if cfg["has_ds"]:
                w1_ref, b1_ref, w2_ref, b2_ref, bd_ref = lrefs
            else:
                w1_ref, b1_ref, w2_ref, b2_ref = lrefs
                bd_ref = None

            def causal_dot(hin, w_ref, d=d, mask=mask):
                # Previous-time tap input: shift rows by d along time via the
                # XLU roll, then zero the causally invalid / wrapped rows with
                # the precomputed 0/1 mask (single VPU multiply, f32).
                if d < T:
                    prev = pltpu.roll(hin, shift=d, axis=0) * mask
                else:
                    prev = jnp.zeros_like(hin)
                # Cin-axis tap packing: one bf16 MXU push, contraction depth
                # 2*Cin, f32 accumulate, no output-lane splitting.
                lhs = jnp.concatenate([prev, hin], axis=-1).astype(jnp.bfloat16)
                return jnp.dot(lhs, w_ref[...],
                               preferred_element_type=jnp.float32)

            # First conv; for has_ds layers the 1x1 downsample is fused into
            # the same matmul (its columns start at lane offset `slot`, a
            # 128-lane boundary, so both slices below are free).
            y1 = causal_dot(h, w1_ref)                   # (NT, slot+cout) or (NT, cout)
            h1 = jnp.maximum(y1[:, :cout] + b1_ref[...], 0.0)
            h2 = jnp.maximum(causal_dot(h1, w2_ref) + b2_ref[...], 0.0)
            if bd_ref is not None:
                res = y1[:, slot:slot + cout] + bd_ref[...]
            else:
                res = h
            h = jnp.maximum(h2 + res, 0.0)

        # Final: channel 0 (last layer has cout == 1, asserted at build time),
        # then the per-batch mean over time as one tiny f32 matmul -> a single
        # lane-dense (N, 1) store.
        out = jnp.dot(pool_ref[...], h[:, 0:1],
                      preferred_element_type=jnp.float32)
        o_ref[...] = out.astype(o_ref.dtype)

    return kernel


def _full_spec(shape):
    zeros = (0,) * len(shape)
    return pl.BlockSpec(shape, lambda: zeros)


# ----------------------------------------------------------------------------
# Host-side packing (one time, at init): Cin-axis tap packing + fused
# downsample columns (at a 128-lane boundary) + bf16 weights.
# ----------------------------------------------------------------------------
def pack_params(params, N, T):
    NT = N * T
    t_idx = np.tile(np.arange(T, dtype=np.float32), N).reshape(NT, 1)
    mask_for, masks = {}, []
    cfgs, flat = [], []
    for p in params:
        w1, w2 = p["w1"], p["w2"]                 # (K=2, Cin, Cout); tap0 -> x[t-d]
        cin, cout = int(w1.shape[1]), int(w1.shape[2])
        d = int(p["dilation"])
        has_ds = p["wd"] is not None

        if d not in mask_for:                     # one mask per distinct dilation
            mask_for[d] = len(masks)
            masks.append(jnp.asarray((t_idx >= d).astype(np.float32)))

        # rows [0:Cin] multiply h_prev (tap 0), rows [Cin:2*Cin] multiply h (tap 1)
        w1p = jnp.concatenate([w1[0], w1[1]], axis=0)       # (2*Cin, Cout)
        w2p = jnp.concatenate([w2[0], w2[1]], axis=0)       # (2*Cout, Cout)

        slot = (-(-cout // 128) * 128) if has_ds else cout
        if has_ds:
            # pad conv-output columns to a 128-lane boundary, then append the
            # downsample columns (which only see the "current" rows of the LHS)
            w1p = jnp.pad(w1p, ((0, 0), (0, slot - cout)))
            ds_cols = jnp.concatenate(
                [jnp.zeros((cin, cout), jnp.float32), p["wd"]], axis=0)
            w1p = jnp.concatenate([w1p, ds_cols], axis=1)   # (2*Cin, slot+Cout)

        flat += [w1p.astype(jnp.bfloat16), p["b1"],
                 w2p.astype(jnp.bfloat16), p["b2"]]
        if has_ds:
            flat.append(p["bd"])
        cfgs.append(dict(dilation=d, cout=cout, has_ds=has_ds,
                         slot=slot, mask_idx=mask_for[d]))
    return cfgs, flat, masks


# ----------------------------------------------------------------------------
# Build the decoder: constants + packed weights once, jitted forward closure.
# ----------------------------------------------------------------------------
def make_tcn_decoder(params, N, T, H, W):
    C0 = H * W
    NT = N * T
    layer_cfgs, flat_weights, masks = pack_params(params, N, T)
    assert layer_cfgs[-1]["cout"] == 1, \
        "final layer must have cout == 1 (torch's view(N, T) requires it)"
    # NOTE: roll+mask causality assumes dilation < T per layer (true for 2**i
    # schedules with small depth); the kernel falls back to a zero prev-tap
    # otherwise.  NT here is a multiple of 8 (sublane tile).
    pool = jnp.repeat(jnp.eye(N, dtype=jnp.float32), T, axis=1) / T    # (N, NT)

    kernel = make_fused_tcn_kernel(layer_cfgs, N, T, n_masks=len(masks))
    consts = list(masks) + [pool]

    def fwd(X):
        # torch: permute(0,2,3,1).view(N, H*W, T); in (row, chan) layout that is
        # simply x[n*T + t, c] = X[n, t, h, w] with c = h*W + w.
        x = X.reshape(N, T, C0).reshape(NT, C0).astype(jnp.float32)
        args = [x] + consts + flat_weights
        in_specs = [_full_spec(a.shape) for a in args]
        return pl.pallas_call(
            kernel,
            out_shape=jax.ShapeDtypeStruct((N, 1), jnp.float32),
            in_specs=in_specs,
            out_specs=_full_spec((N, 1)),
        )(*args)

    return jax.jit(fwd)


# ----------------------------------------------------------------------------
# Parameter setup (plain JAX glue): weight_norm reparam applied here.
# ----------------------------------------------------------------------------
def init_params(key, num_inputs, layer_list, kernel_size=2):
    params = []
    in_ch = num_inputs
    for i, out_ch in enumerate(layer_list):
        dilation = 2 ** i
        keys = jax.random.split(key, 8)
        key = keys[0]

        def wn_conv(kv, kg, kb, cin, cout):
            v = 0.01 * jax.random.normal(kv, (cout, cin, kernel_size),
                                         dtype=jnp.float32)
            g = 0.5 + 0.1 * jax.random.uniform(kg, (cout,), dtype=jnp.float32)
            norm = jnp.sqrt(jnp.sum(v * v, axis=(1, 2), keepdims=True)) + 1e-12
            w = g[:, None, None] * v / norm                  # (cout, cin, K)
            b = 0.01 * jax.random.normal(kb, (1, cout), dtype=jnp.float32)
            # kernel layout: (K, cin, cout); tap 0 = x[t-d], tap 1 = x[t]
            return jnp.transpose(w, (2, 1, 0)), b

        w1, b1 = wn_conv(keys[1], keys[2], keys[3], in_ch, out_ch)
        w2, b2 = wn_conv(keys[4], keys[5], keys[6], out_ch, out_ch)

        if in_ch != out_ch:
            kd, kdb = jax.random.split(keys[7])
            wd = 0.01 * jax.random.normal(kd, (out_ch, in_ch), dtype=jnp.float32)
            wd = jnp.transpose(wd, (1, 0))                   # (cin, cout)
            bd = 0.01 * jax.random.normal(kdb, (1, out_ch), dtype=jnp.float32)
        else:
            wd, bd = None, None

        params.append(dict(w1=w1, b1=b1, w2=w2, b2=b2, wd=wd, bd=bd,
                           dilation=dilation))
        in_ch = out_ch
    return params


# ----------------------------------------------------------------------------
# Pure-JAX reference (mirrors the kernel's bf16 matmul operands, f32 accum,
# so the comparison checks structure/taps/masks/residual/pooling tightly).
# ----------------------------------------------------------------------------
def ref_forward(X, params):
    N, T, H, W = X.shape
    x = X.reshape(N, T, H * W).astype(jnp.float32)           # (N, T, C)

    def causal(h, w, b, d):
        hp = jnp.pad(h, ((0, 0), (d, 0), (0, 0)))[:, :T, :]
        lhs = jnp.concatenate([hp, h], axis=-1).astype(jnp.bfloat16)
        wpk = jnp.concatenate([w[0], w[1]], axis=0).astype(jnp.bfloat16)
        return jnp.dot(lhs, wpk, preferred_element_type=jnp.float32) + b

    for p in params:
        d = p["dilation"]
        h1 = jnp.maximum(causal(x, p["w1"], p["b1"], d), 0.0)
        h2 = jnp.maximum(causal(h1, p["w2"], p["b2"], d), 0.0)
        if p["wd"] is None:
            res = x
        else:
            res = jnp.dot(x.astype(jnp.bfloat16),
                          p["wd"].astype(jnp.bfloat16),
                          preferred_element_type=jnp.float32) + p["bd"]
        x = jnp.maximum(h2 + res, 0.0)

    return jnp.mean(x[:, :, 0], axis=1, keepdims=True)


if __name__ == "__main__":
    # Small shapes consistent with the module: channels = H*W, seq = T,
    # layer_list ends in 1 so the final view(N, T) is valid.
    N, T, H, W = 2, 8, 4, 4
    num_inputs = H * W
    layer_list = [8, 4, 1]
    max_len = T  # unused by the forward, kept for interface parity

    key = jax.random.PRNGKey(0)
    kx, kp = jax.random.split(key)
    X = jax.random.normal(kx, (N, T, H, W), dtype=jnp.float32)

    params = init_params(kp, num_inputs, layer_list, kernel_size=2)
    fwd = make_tcn_decoder(params, N, T, H, W)   # one-time packing + constants

    out = jax.block_until_ready(fwd(X))
    ref = jax.block_until_ready(ref_forward(X, params))

    np.testing.assert_allclose(np.asarray(out), np.asarray(ref),
                               rtol=1e-2, atol=1e-5)
    assert out.shape == (N, 1)

    print("KERNEL_OK")
</pallas_src>

<mosaic_0001>
module attributes {stable_mosaic.version = 11 : i64} {
  func.func @kernel(%arg0: memref<16x16xf32, #tpu.memory_space<vmem>>, %arg1: memref<16x1xf32, #tpu.memory_space<vmem>>, %arg2: memref<16x1xf32, #tpu.memory_space<vmem>>, %arg3: memref<16x1xf32, #tpu.memory_space<vmem>>, %arg4: memref<2x16xf32, #tpu.memory_space<vmem>>, %arg5: memref<32x136xbf16, #tpu.memory_space<vmem>>, %arg6: memref<1x8xf32, #tpu.memory_space<vmem>>, %arg7: memref<16x8xbf16, #tpu.memory_space<vmem>>, %arg8: memref<1x8xf32, #tpu.memory_space<vmem>>, %arg9: memref<1x8xf32, #tpu.memory_space<vmem>>, %arg10: memref<16x132xbf16, #tpu.memory_space<vmem>>, %arg11: memref<1x4xf32, #tpu.memory_space<vmem>>, %arg12: memref<8x4xbf16, #tpu.memory_space<vmem>>, %arg13: memref<1x4xf32, #tpu.memory_space<vmem>>, %arg14: memref<1x4xf32, #tpu.memory_space<vmem>>, %arg15: memref<8x129xbf16, #tpu.memory_space<vmem>>, %arg16: memref<1x1xf32, #tpu.memory_space<vmem>>, %arg17: memref<2x1xbf16, #tpu.memory_space<vmem>>, %arg18: memref<1x1xf32, #tpu.memory_space<vmem>>, %arg19: memref<1x1xf32, #tpu.memory_space<vmem>>, %arg20: memref<2x1xf32, #tpu.memory_space<vmem>>) attributes {dimension_semantics = [], scalar_prefetch = 0 : i64, scratch_operands = 0 : i64, tpu.core_type = #tpu.core_type<tc>} {
    %c0 = arith.constant 0 : index
    %c0_0 = arith.constant 0 : index
    %0 = vector.load %arg1[%c0, %c0_0] : memref<16x1xf32, #tpu.memory_space<vmem>>, vector<16x1xf32>
    %c0_1 = arith.constant 0 : index
    %c0_2 = arith.constant 0 : index
    %1 = vector.load %arg2[%c0_1, %c0_2] : memref<16x1xf32, #tpu.memory_space<vmem>>, vector<16x1xf32>
    %c0_3 = arith.constant 0 : index
    %c0_4 = arith.constant 0 : index
    %2 = vector.load %arg3[%c0_3, %c0_4] : memref<16x1xf32, #tpu.memory_space<vmem>>, vector<16x1xf32>
    %c0_5 = arith.constant 0 : index
    %c0_6 = arith.constant 0 : index
    %3 = vector.load %arg0[%c0_5, %c0_6] : memref<16x16xf32, #tpu.memory_space<vmem>>, vector<16x16xf32>
    %c1_i32 = arith.constant 1 : i32
    %4 = tpu.dynamic_rotate %3 by %c1_i32 dim 0 : vector<16x16xf32>, i32 -> vector<16x16xf32>
    %5 = vector.broadcast %0 : vector<16x1xf32> to vector<16x16xf32>
    %6 = arith.mulf %4, %5 : vector<16x16xf32>
    %7 = tpu.concatenate %6, %3 in 1 : vector<16x16xf32>, vector<16x16xf32> -> vector<16x32xf32>
    %8 = arith.truncf %7 : vector<16x32xf32> to vector<16x32xbf16>
    %c0_7 = arith.constant 0 : index
    %c0_8 = arith.constant 0 : index
    %9 = vector.load %arg5[%c0_7, %c0_8] : memref<32x136xbf16, #tpu.memory_space<vmem>>, vector<32x136xbf16>
    %cst = arith.constant dense<0.000000e+00> : vector<16x136xf32>
    %10 = tpu.matmul %8, %9, %cst {dimension_numbers = #tpu.dot_dimension_numbers<[1], [0], [0], [1], [0, 0, 1, 1], [], []>} : vector<16x32xbf16>, vector<32x136xbf16>, vector<16x136xf32> -> vector<16x136xf32>
    %11 = vector.extract_strided_slice %10 {offsets = [0, 0], sizes = [16, 8], strides = [1, 1]} : vector<16x136xf32> to vector<16x8xf32>
    %c0_9 = arith.constant 0 : index
    %c0_10 = arith.constant 0 : index
    %12 = vector.load %arg6[%c0_9, %c0_10] : memref<1x8xf32, #tpu.memory_space<vmem>>, vector<1x8xf32>
    %13 = vector.broadcast %12 : vector<1x8xf32> to vector<16x8xf32>
    %14 = arith.addf %11, %13 : vector<16x8xf32>
    %cst_11 = arith.constant 0.000000e+00 : f32
    %15 = vector.broadcast %cst_11 : f32 to vector<16x8xf32>
    %16 = arith.maximumf %14, %15 : vector<16x8xf32>
    %c1_i32_12 = arith.constant 1 : i32
    %17 = tpu.dynamic_rotate %16 by %c1_i32_12 dim 0 : vector<16x8xf32>, i32 -> vector<16x8xf32>
    %18 = vector.broadcast %0 : vector<16x1xf32> to vector<16x8xf32>
    %19 = arith.mulf %17, %18 : vector<16x8xf32>
    %20 = tpu.concatenate %19, %16 in 1 : vector<16x8xf32>, vector<16x8xf32> -> vector<16x16xf32>
    %21 = arith.truncf %20 : vector<16x16xf32> to vector<16x16xbf16>
    %c0_13 = arith.constant 0 : index
    %c0_14 = arith.constant 0 : index
    %22 = vector.load %arg7[%c0_13, %c0_14] : memref<16x8xbf16, #tpu.memory_space<vmem>>, vector<16x8xbf16>
    %cst_15 = arith.constant dense<0.000000e+00> : vector<16x8xf32>
    %23 = tpu.matmul %21, %22, %cst_15 {dimension_numbers = #tpu.dot_dimension_numbers<[1], [0], [0], [1], [0, 0, 1, 1], [], []>} : vector<16x16xbf16>, vector<16x8xbf16>, vector<16x8xf32> -> vector<16x8xf32>
    %c0_16 = arith.constant 0 : index
    %c0_17 = arith.constant 0 : index
    %24 = vector.load %arg8[%c0_16, %c0_17] : memref<1x8xf32, #tpu.memory_space<vmem>>, vector<1x8xf32>
    %25 = vector.broadcast %24 : vector<1x8xf32> to vector<16x8xf32>
    %26 = arith.addf %23, %25 : vector<16x8xf32>
    %cst_18 = arith.constant 0.000000e+00 : f32
    %27 = vector.broadcast %cst_18 : f32 to vector<16x8xf32>
    %28 = arith.maximumf %26, %27 : vector<16x8xf32>
    %29 = vector.extract_strided_slice %10 {offsets = [0, 128], sizes = [16, 8], strides = [1, 1]} : vector<16x136xf32> to vector<16x8xf32>
    %c0_19 = arith.constant 0 : index
    %c0_20 = arith.constant 0 : index
    %30 = vector.load %arg9[%c0_19, %c0_20] : memref<1x8xf32, #tpu.memory_space<vmem>>, vector<1x8xf32>
    %31 = vector.broadcast %30 : vector<1x8xf32> to vector<16x8xf32>
    %32 = arith.addf %29, %31 : vector<16x8xf32>
    %33 = arith.addf %28, %32 : vector<16x8xf32>
    %cst_21 = arith.constant 0.000000e+00 : f32
    %34 = vector.broadcast %cst_21 : f32 to vector<16x8xf32>
    %35 = arith.maximumf %33, %34 : vector<16x8xf32>
    %c2_i32 = arith.constant 2 : i32
    %36 = tpu.dynamic_rotate %35 by %c2_i32 dim 0 : vector<16x8xf32>, i32 -> vector<16x8xf32>
    %37 = vector.broadcast %1 : vector<16x1xf32> to vector<16x8xf32>
    %38 = arith.mulf %36, %37 : vector<16x8xf32>
    %39 = tpu.concatenate %38, %35 in 1 : vector<16x8xf32>, vector<16x8xf32> -> vector<16x16xf32>
    %40 = arith.truncf %39 : vector<16x16xf32> to vector<16x16xbf16>
    %c0_22 = arith.constant 0 : index
    %c0_23 = arith.constant 0 : index
    %41 = vector.load %arg10[%c0_22, %c0_23] : memref<16x132xbf16, #tpu.memory_space<vmem>>, vector<16x132xbf16>
    %cst_24 = arith.constant dense<0.000000e+00> : vector<16x132xf32>
    %42 = tpu.matmul %40, %41, %cst_24 {dimension_numbers = #tpu.dot_dimension_numbers<[1], [0], [0], [1], [0, 0, 1, 1], [], []>} : vector<16x16xbf16>, vector<16x132xbf16>, vector<16x132xf32> -> vector<16x132xf32>
    %43 = vector.extract_strided_slice %42 {offsets = [0, 0], sizes = [16, 4], strides = [1, 1]} : vector<16x132xf32> to vector<16x4xf32>
    %c0_25 = arith.constant 0 : index
    %c0_26 = arith.constant 0 : index
    %44 = vector.load %arg11[%c0_25, %c0_26] : memref<1x4xf32, #tpu.memory_space<vmem>>, vector<1x4xf32>
    %45 = vector.broadcast %44 : vector<1x4xf32> to vector<16x4xf32>
    %46 = arith.addf %43, %45 : vector<16x4xf32>
    %cst_27 = arith.constant 0.000000e+00 : f32
    %47 = vector.broadcast %cst_27 : f32 to vector<16x4xf32>
    %48 = arith.maximumf %46, %47 : vector<16x4xf32>
    %c2_i32_28 = arith.constant 2 : i32
    %49 = tpu.dynamic_rotate %48 by %c2_i32_28 dim 0 : vector<16x4xf32>, i32 -> vector<16x4xf32>
    %50 = vector.broadcast %1 : vector<16x1xf32> to vector<16x4xf32>
    %51 = arith.mulf %49, %50 : vector<16x4xf32>
    %52 = tpu.concatenate %51, %48 in 1 : vector<16x4xf32>, vector<16x4xf32> -> vector<16x8xf32>
    %53 = arith.truncf %52 : vector<16x8xf32> to vector<16x8xbf16>
    %c0_29 = arith.constant 0 : index
    %c0_30 = arith.constant 0 : index
    %54 = vector.load %arg12[%c0_29, %c0_30] : memref<8x4xbf16, #tpu.memory_space<vmem>>, vector<8x4xbf16>
    %cst_31 = arith.constant dense<0.000000e+00> : vector<16x4xf32>
    %55 = tpu.matmul %53, %54, %cst_31 {dimension_numbers = #tpu.dot_dimension_numbers<[1], [0], [0], [1], [0, 0, 1, 1], [], []>} : vector<16x8xbf16>, vector<8x4xbf16>, vector<16x4xf32> -> vector<16x4xf32>
    %c0_32 = arith.constant 0 : index
    %c0_33 = arith.constant 0 : index
    %56 = vector.load %arg13[%c0_32, %c0_33] : memref<1x4xf32, #tpu.memory_space<vmem>>, vector<1x4xf32>
    %57 = vector.broadcast %56 : vector<1x4xf32> to vector<16x4xf32>
    %58 = arith.addf %55, %57 : vector<16x4xf32>
    %cst_34 = arith.constant 0.000000e+00 : f32
    %59 = vector.broadcast %cst_34 : f32 to vector<16x4xf32>
    %60 = arith.maximumf %58, %59 : vector<16x4xf32>
    %61 = vector.extract_strided_slice %42 {offsets = [0, 128], sizes = [16, 4], strides = [1, 1]} : vector<16x132xf32> to vector<16x4xf32>
    %c0_35 = arith.constant 0 : index
    %c0_36 = arith.constant 0 : index
    %62 = vector.load %arg14[%c0_35, %c0_36] : memref<1x4xf32, #tpu.memory_space<vmem>>, vector<1x4xf32>
    %63 = vector.broadcast %62 : vector<1x4xf32> to vector<16x4xf32>
    %64 = arith.addf %61, %63 : vector<16x4xf32>
    %65 = arith.addf %60, %64 : vector<16x4xf32>
    %cst_37 = arith.constant 0.000000e+00 : f32
    %66 = vector.broadcast %cst_37 : f32 to vector<16x4xf32>
    %67 = arith.maximumf %65, %66 : vector<16x4xf32>
    %c4_i32 = arith.constant 4 : i32
    %68 = tpu.dynamic_rotate %67 by %c4_i32 dim 0 : vector<16x4xf32>, i32 -> vector<16x4xf32>
    %69 = vector.broadcast %2 : vector<16x1xf32> to vector<16x4xf32>
    %70 = arith.mulf %68, %69 : vector<16x4xf32>
    %71 = tpu.concatenate %70, %67 in 1 : vector<16x4xf32>, vector<16x4xf32> -> vector<16x8xf32>
    %72 = arith.truncf %71 : vector<16x8xf32> to vector<16x8xbf16>
    %c0_38 = arith.constant 0 : index
    %c0_39 = arith.constant 0 : index
    %73 = vector.load %arg15[%c0_38, %c0_39] : memref<8x129xbf16, #tpu.memory_space<vmem>>, vector<8x129xbf16>
    %cst_40 = arith.constant dense<0.000000e+00> : vector<16x129xf32>
    %74 = tpu.matmul %72, %73, %cst_40 {dimension_numbers = #tpu.dot_dimension_numbers<[1], [0], [0], [1], [0, 0, 1, 1], [], []>} : vector<16x8xbf16>, vector<8x129xbf16>, vector<16x129xf32> -> vector<16x129xf32>
    %75 = vector.extract_strided_slice %74 {offsets = [0, 0], sizes = [16, 1], strides = [1, 1]} : vector<16x129xf32> to vector<16x1xf32>
    %c0_41 = arith.constant 0 : index
    %c0_42 = arith.constant 0 : index
    %76 = vector.load %arg16[%c0_41, %c0_42] : memref<1x1xf32, #tpu.memory_space<vmem>>, vector<1x1xf32>
    %77 = vector.broadcast %76 : vector<1x1xf32> to vector<16x1xf32>
    %78 = arith.addf %75, %77 : vector<16x1xf32>
    %cst_43 = arith.constant 0.000000e+00 : f32
    %79 = vector.broadcast %cst_43 : f32 to vector<16x1xf32>
    %80 = arith.maximumf %78, %79 : vector<16x1xf32>
    %c4_i32_44 = arith.constant 4 : i32
    %81 = tpu.dynamic_rotate %80 by %c4_i32_44 dim 0 : vector<16x1xf32>, i32 -> vector<16x1xf32>
    %82 = arith.mulf %81, %2 : vector<16x1xf32>
    %83 = tpu.concatenate %82, %80 in 1 : vector<16x1xf32>, vector<16x1xf32> -> vector<16x2xf32>
    %84 = arith.truncf %83 : vector<16x2xf32> to vector<16x2xbf16>
    %c0_45 = arith.constant 0 : index
    %c0_46 = arith.constant 0 : index
    %85 = vector.load %arg17[%c0_45, %c0_46] : memref<2x1xbf16, #tpu.memory_space<vmem>>, vector<2x1xbf16>
    %cst_47 = arith.constant dense<0.000000e+00> : vector<16x1xf32>
    %86 = tpu.matmul %84, %85, %cst_47 {dimension_numbers = #tpu.dot_dimension_numbers<[1], [0], [0], [1], [0, 0, 1, 1], [], []>} : vector<16x2xbf16>, vector<2x1xbf16>, vector<16x1xf32> -> vector<16x1xf32>
    %c0_48 = arith.constant 0 : index
    %c0_49 = arith.constant 0 : index
    %87 = vector.load %arg18[%c0_48, %c0_49] : memref<1x1xf32, #tpu.memory_space<vmem>>, vector<1x1xf32>
    %88 = vector.broadcast %87 : vector<1x1xf32> to vector<16x1xf32>
    %89 = arith.addf %86, %88 : vector<16x1xf32>
    %cst_50 = arith.constant 0.000000e+00 : f32
    %90 = vector.broadcast %cst_50 : f32 to vector<16x1xf32>
    %91 = arith.maximumf %89, %90 : vector<16x1xf32>
    %92 = vector.extract_strided_slice %74 {offsets = [0, 128], sizes = [16, 1], strides = [1, 1]} : vector<16x129xf32> to vector<16x1xf32>
    %c0_51 = arith.constant 0 : index
    %c0_52 = arith.constant 0 : index
    %93 = vector.load %arg19[%c0_51, %c0_52] : memref<1x1xf32, #tpu.memory_space<vmem>>, vector<1x1xf32>
    %94 = vector.broadcast %93 : vector<1x1xf32> to vector<16x1xf32>
    %95 = arith.addf %92, %94 : vector<16x1xf32>
    %96 = arith.addf %91, %95 : vector<16x1xf32>
    %cst_53 = arith.constant 0.000000e+00 : f32
    %97 = vector.broadcast %cst_53 : f32 to vector<16x1xf32>
    %98 = arith.maximumf %96, %97 : vector<16x1xf32>
    %c0_54 = arith.constant 0 : index
    %c0_55 = arith.constant 0 : index
    %99 = vector.load %arg4[%c0_54, %c0_55] : memref<2x16xf32, #tpu.memory_space<vmem>>, vector<2x16xf32>
    %cst_56 = arith.constant dense<0.000000e+00> : vector<2x1xf32>
    %100 = tpu.matmul %99, %98, %cst_56 {dimension_numbers = #tpu.dot_dimension_numbers<[1], [0], [0], [1], [0, 0, 1, 1], [], []>} : vector<2x16xf32>, vector<16x1xf32>, vector<2x1xf32> -> vector<2x1xf32>
    %c0_57 = arith.constant 0 : index
    %c0_58 = arith.constant 0 : index
    %101 = vector.load %arg20[%c0_57, %c0_58] : memref<2x1xf32, #tpu.memory_space<vmem>>, vector<2x1xf32>
    tpu.vector_store %arg20[%c0_57, %c0_58], %100 {strides = array<i32>} : memref<2x1xf32, #tpu.memory_space<vmem>>, vector<2x1xf32>,
    return
  }
}

</mosaic_0001>

<llo_original>
// kernel: fwd.1
$region0: #{fwd.1}
  #allocation0 [shape = 'u32[]', space=smem, size = 0x4, offset = 0x4, fixed_abs, tag = 'smem constant byte address 0x4 - core index']
  #allocation1 [shape = 'u32[72,128]{1,0:T(1,128)}', space=vmem, size = 0x9000, scoped, tag = 'internal scratch']
  #allocation2 [shape = 'f32[1,1]{1,0:T(1,128)S(1)}', space=vmem, size = 0x200, scoped, tag = 'scoped memory for fwd.1']
  #allocation3 [shape = 'f32[1,1]{1,0:T(1,128)S(1)}', space=vmem, size = 0x200, scoped, tag = 'scoped memory for fwd.1']
  #allocation4 [shape = 'f32[1,1]{1,0:T(1,128)S(1)}', space=vmem, size = 0x200, scoped, tag = 'scoped memory for fwd.1']
  %s0 = inlined_call_operand.vmem [shape: f32[16,16], index: 0, kind: input, shape index: {}]
  %s1 = inlined_call_operand.vmem [shape: f32[16,1], index: 1, kind: input, shape index: {}]
  %s2 = inlined_call_operand.vmem [shape: f32[16,1], index: 2, kind: input, shape index: {}]
  %s3 = inlined_call_operand.vmem [shape: f32[16,1], index: 3, kind: input, shape index: {}]
  %s4 = inlined_call_operand.vmem [shape: f32[2,16], index: 4, kind: input, shape index: {}]
  %s5 = inlined_call_operand.vmem [shape: bf16[32,136], index: 5, kind: input, shape index: {}]
  %s6 = inlined_call_operand.vmem [shape: f32[1,8], index: 6, kind: input, shape index: {}]
  %s7 = inlined_call_operand.vmem [shape: bf16[16,8], index: 7, kind: input, shape index: {}]
  %s8 = inlined_call_operand.vmem [shape: f32[1,8], index: 8, kind: input, shape index: {}]
  %s9 = inlined_call_operand.vmem [shape: f32[1,8], index: 9, kind: input, shape index: {}]
  %s10 = inlined_call_operand.vmem [shape: bf16[16,132], index: 10, kind: input, shape index: {}]
  %s11 = inlined_call_operand.vmem [shape: f32[1,4], index: 11, kind: input, shape index: {}]
  %s12 = inlined_call_operand.vmem [shape: bf16[8,4], index: 12, kind: input, shape index: {}]
  %s13 = inlined_call_operand.vmem [shape: f32[1,4], index: 13, kind: input, shape index: {}]
  %s14 = inlined_call_operand.vmem [shape: f32[1,4], index: 14, kind: input, shape index: {}]
  %s15 = inlined_call_operand.vmem [shape: bf16[8,129], index: 15, kind: input, shape index: {}]
  %s16 = inlined_call_operand.<no memory space> [shape: f32[1,1], index: 16, kind: input, shape index: {}]
  %s17 = inlined_call_operand.vmem [shape: bf16[2,1], index: 17, kind: input, shape index: {}]
  %s18 = inlined_call_operand.<no memory space> [shape: f32[1,1], index: 18, kind: input, shape index: {}]
  %s19 = inlined_call_operand.<no memory space> [shape: f32[1,1], index: 19, kind: input, shape index: {}]
  %s20 = inlined_call_operand.vmem [shape: f32[2,1], index: 20, kind: output, shape index: {}]
  %s21 = sld [smem:[#allocation0]]
  $region90: #{fwd.1} parent=0
    _
  %s23 = ssub.s32 1, %s21
  %s24 = scalar_select 0, %s23, %s21
  %v25 = vstv %s16
  %26 = vst [vmem:[#allocation2] sm:$0x1] %v25
  %v27 = vstv %s18
  %28 = vst [vmem:[#allocation3] sm:$0x1] %v27
  %v29 = vstv %s19
  %30 = vst [vmem:[#allocation4] sm:$0x1] %v29
  // Predicated region
  $region2: #{fwd.1} parent=0 // pred_check
    _
  $region3: #{fwd.1} parent=0 // pred_check_branch
    %32 = sbr.rel (0) target = $region5
  $region4: #{fwd.1} parent=0 // pred_region
    _
  $region5: #{fwd.1} parent=0 // pred_fallthru
    _
  // Predicated region
  $region6: #{fwd.1} parent=0 // pred_check
    _
  $region7: #{fwd.1} parent=0 // pred_check_branch
    %34 = sbr.rel (0) target = $region9
  $region8: #{fwd.1} parent=0 // pred_region
    _
  $region9: #{fwd.1} parent=0 // pred_fallthru
    _
  // Predicated region
  $region10: #{fwd.1} parent=0 // pred_check
    _
  $region11: #{fwd.1} parent=0 // pred_check_branch
    %36 = sbr.rel (0) target = $region13
  $region12: #{fwd.1} parent=0 // pred_region
    _
  $region13: #{fwd.1} parent=0 // pred_fallthru
    _
  // Predicated region
  $region14: #{fwd.1} parent=0 // pred_check
    _
  $region15: #{fwd.1} parent=0 // pred_check_branch
    %38 = sbr.rel (0) target = $region17
  $region16: #{fwd.1} parent=0 // pred_region
    _
  $region17: #{fwd.1} parent=0 // pred_fallthru
    _
  // Predicated region
  $region18: #{fwd.1} parent=0 // pred_check
    _
  $region19: #{fwd.1} parent=0 // pred_check_branch
    %40 = sbr.rel (0) target = $region21
  $region20: #{fwd.1} parent=0 // pred_region
    _
  $region21: #{fwd.1} parent=0 // pred_fallthru
    _
  // Predicated region
  $region22: #{fwd.1} parent=0 // pred_check
    _
  $region23: #{fwd.1} parent=0 // pred_check_branch
    %42 = sbr.rel (0) target = $region25
  $region24: #{fwd.1} parent=0 // pred_region
    _
  $region25: #{fwd.1} parent=0 // pred_fallthru
    _
  // Predicated region
  $region26: #{fwd.1} parent=0 // pred_check
    _
  $region27: #{fwd.1} parent=0 // pred_check_branch
    %44 = sbr.rel (0) target = $region29
  $region28: #{fwd.1} parent=0 // pred_region
    _
  $region29: #{fwd.1} parent=0 // pred_fallthru
    _
  // Predicated region
  $region30: #{fwd.1} parent=0 // pred_check
    _
  $region31: #{fwd.1} parent=0 // pred_check_branch
    %46 = sbr.rel (0) target = $region33
  $region32: #{fwd.1} parent=0 // pred_region
    _
  $region33: #{fwd.1} parent=0 // pred_fallthru
    _
  // Predicated region
  $region34: #{fwd.1} parent=0 // pred_check
    _
  $region35: #{fwd.1} parent=0 // pred_check_branch
    %48 = sbr.rel (0) target = $region37
  $region36: #{fwd.1} parent=0 // pred_region
    _
  $region37: #{fwd.1} parent=0 // pred_fallthru
    _
  // Predicated region
  $region38: #{fwd.1} parent=0 // pred_check
    _
  $region39: #{fwd.1} parent=0 // pred_check_branch
    %50 = sbr.rel (0) target = $region41
  $region40: #{fwd.1} parent=0 // pred_region
    _
  $region41: #{fwd.1} parent=0 // pred_fallthru
    _
  // Predicated region
  $region42: #{fwd.1} parent=0 // pred_check
    _
  $region43: #{fwd.1} parent=0 // pred_check_branch
    %52 = sbr.rel (0) target = $region45
  $region44: #{fwd.1} parent=0 // pred_region
    _
  $region45: #{fwd.1} parent=0 // pred_fallthru
    _
  // Predicated region
  $region46: #{fwd.1} parent=0 // pred_check
    _
  $region47: #{fwd.1} parent=0 // pred_check_branch
    %54 = sbr.rel (0) target = $region49
  $region48: #{fwd.1} parent=0 // pred_region
    _
  $region49: #{fwd.1} parent=0 // pred_fallthru
    _
  // Predicated region
  $region50: #{fwd.1} parent=0 // pred_check
    _
  $region51: #{fwd.1} parent=0 // pred_check_branch
    %56 = sbr.rel (0) target = $region53
  $region52: #{fwd.1} parent=0 // pred_region
    _
  $region53: #{fwd.1} parent=0 // pred_fallthru
    _
  // Predicated region
  $region54: #{fwd.1} parent=0 // pred_check
    _
  $region55: #{fwd.1} parent=0 // pred_check_branch
    %58 = sbr.rel (0) target = $region57
  $region56: #{fwd.1} parent=0 // pred_region
    _
  $region57: #{fwd.1} parent=0 // pred_fallthru
    _
  // Predicated region
  $region58: #{fwd.1} parent=0 // pred_check
    _
  $region59: #{fwd.1} parent=0 // pred_check_branch
    %60 = sbr.rel (0) target = $region61
  $region60: #{fwd.1} parent=0 // pred_region
    _
  $region61: #{fwd.1} parent=0 // pred_fallthru
    _
  // Predicated region
  $region62: #{fwd.1} parent=0 // pred_check
    _
  $region63: #{fwd.1} parent=0 // pred_check_branch
    %62 = sbr.rel (0) target = $region65
  $region64: #{fwd.1} parent=0 // pred_region
    _
  $region65: #{fwd.1} parent=0 // pred_fallthru
    _
  // Predicated region
  $region66: #{fwd.1} parent=0 // pred_check
    _
  $region67: #{fwd.1} parent=0 // pred_check_branch
    %64 = sbr.rel (0) target = $region69
  $region68: #{fwd.1} parent=0 // pred_region
    _
  $region69: #{fwd.1} parent=0 // pred_fallthru
    _
  // Predicated region
  $region70: #{fwd.1} parent=0 // pred_check
    _
  $region71: #{fwd.1} parent=0 // pred_check_branch
    %66 = sbr.rel (0) target = $region73
  $region72: #{fwd.1} parent=0 // pred_region
    _
  $region73: #{fwd.1} parent=0 // pred_fallthru
    _
  // Predicated region
  $region74: #{fwd.1} parent=0 // pred_check
    _
  $region75: #{fwd.1} parent=0 // pred_check_branch
    %68 = sbr.rel (0) target = $region77
  $region76: #{fwd.1} parent=0 // pred_region
    _
  $region77: #{fwd.1} parent=0 // pred_fallthru
    _
  // Predicated region
  $region78: #{fwd.1} parent=0 // pred_check
    _
  $region79: #{fwd.1} parent=0 // pred_check_branch
    %70 = sbr.rel (0) target = $region81
  $region80: #{fwd.1} parent=0 // pred_region
    _
  $region81: #{fwd.1} parent=0 // pred_fallthru
    _
  %v72 = vld [vmem:[%s1] sm:$0xff]
  %v73 = vld [vmem:[%s1 + $0x8] sm:$0xff]
  %v74 = vld [vmem:[%s2] sm:$0xff]
  %v75 = vld [vmem:[%s2 + $0x8] sm:$0xff]
  %v76 = vld [vmem:[%s3] sm:$0xff]
  %v77 = vld [vmem:[%s3 + $0x8] sm:$0xff]
  %v78 = vld [vmem:[%s0] sm:$0xff]
  %v79 = vld [vmem:[%s0 + $0x8] sm:$0xff]
  %v80 = vrot.slane %v78, 7
  %v81 = vrot.slane %v79, 7
  %v82 = vlaneseq
  %v83 = vshrl.u32 %v82, 7
  %vm84 = vcmp.lt.s32.totalorder %v83, 1
  %v85 = vsel %vm84, %v80, %v81
  %v86 = vsel %vm84, %v81, %v80
  %88 = vset.pattern.permute.xlu0 0
  %89 = vperm.xlu0 %88, %v72
  %v90 = vpop.permute.xlu0 %89
  %93 = vset.pattern.permute.xlu0 0
  %94 = vperm.xlu0 %93, %v73
  %v95 = vpop.permute.xlu0 %94
  %v97 = vmul.f32 %v86, %v90
  %v98 = vmul.f32 %v85, %v95
  %101 = vrot.lane.b32.xlu0 %v78, 16
  %v102 = vpop.permute.xlu0 %101
  %103 = vrot.lane.b32.xlu0 %v79, 16
  %v104 = vpop.permute.xlu0 %103
  %vm107 = vcmask 130048
  %v108 = vsel %vm107, %v97, %v102
  %v109 = vsel %vm107, %v98, %v104
  %v110 = vpack.c.bf16 %v109, %v108
  %v111 = vld [vmem:[%s5] sm:$0xff]
  %v112 = vld [vmem:[%s5 + $0x8] sm:$0xff]
  %v113 = vld [vmem:[%s5 + $0x10] sm:$0xff]
  %v114 = vld [vmem:[%s5 + $0x18] sm:$0xff]
  %v119 = vunpack.c.l.b16 %v111
  %v120 = vunpack.c.h.b16 %v111
  %v121 = vunpack.c.l.b16 %v112
  %v122 = vunpack.c.h.b16 %v112
  %v123 = vunpack.c.l.b16 %v113
  %v124 = vunpack.c.h.b16 %v113
  %v125 = vunpack.c.l.b16 %v114
  %v126 = vunpack.c.h.b16 %v114
  %v127 = vpack.c.b16 %v121, %v119
  %v128 = vpack.c.b16 %v122, %v120
  %v129 = vpack.c.b16 %v125, %v123
  %v130 = vpack.c.b16 %v126, %v124
  %vm135 = vcmask 261120
  %v137 = vsel %vm135, %v110, 0
  %139 = vmatpush.bf16.msra.mxu0 0
  %140 = vmatpush.bf16.msra.mxu0 0
  %141 = vmatpush.bf16.msra.mxu0 0
  %142 = vmatpush.bf16.msra.mxu0 0
  %143 = vmatpush.bf16.msra.mxu0 0
  %144 = vmatpush.bf16.msra.mxu0 0
  %145 = vmatpush.bf16.msra.mxu0 %v129
  %146 = vmatpush.bf16.msra.mxu0 %v127
  %147 = vmatmul.bf16.gmra.mxu0 %v137
  %v148 = vpop.f32.mrf.mxu0
  %v149 = vadd.f32 0.0, %v148
  %v150 = vpop.f32.mrf.mxu0
  %v151 = vadd.f32 0.0, %v150
  %152 = vdwg.mxu0
  %153 = vmatpush.bf16.msra.mxu0 0
  %154 = vmatpush.bf16.msra.mxu0 0
  %155 = vmatpush.bf16.msra.mxu0 0
  %156 = vmatpush.bf16.msra.mxu0 0
  %157 = vmatpush.bf16.msra.mxu0 0
  %158 = vmatpush.bf16.msra.mxu0 0
  %159 = vmatpush.bf16.msra.mxu0 %v130
  %160 = vmatpush.bf16.msra.mxu0 %v128
  %161 = vmatmul.bf16.gmra.mxu0 %v137
  %v162 = vpop.f32.mrf.mxu0
  %v163 = vadd.f32 0.0, %v162
  %v164 = vpop.f32.mrf.mxu0
  %v165 = vadd.f32 0.0, %v164
  %166 = vdwg.mxu0
  %v167 = vld [vmem:[%s6] sm:$0x1]
  %v169 = vperm.slane %v167, 0
  %v171 = vadd.f32 %v149, %v169
  %v172 = vadd.f32 %v151, %v169
  %v173 = vmax.f32 %v171, 0.0
  %v174 = vmax.f32 %v172, 0.0
  %v175 = vrot.slane %v173, 7
  %v176 = vrot.slane %v174, 7
  %v177 = vsel %vm84, %v175, %v176
  %v178 = vsel %vm84, %v176, %v175
  %v179 = vmul.f32 %v178, %v90
  %v180 = vmul.f32 %v177, %v95
  %183 = vrot.lane.b32.xlu0 %v173, 8
  %v184 = vpop.permute.xlu0 %183
  %185 = vrot.lane.b32.xlu0 %v174, 8
  %v186 = vpop.permute.xlu0 %185
  %vm189 = vcmask 64512
  %v190 = vsel %vm189, %v179, %v184
  %v191 = vsel %vm189, %v180, %v186
  %v192 = vpack.c.bf16 %v191, %v190
  %v193 = vld [vmem:[%s7] sm:$0xf]
  %v194 = vld [vmem:[%s7 + $0x4] sm:$0xf]
  %v195 = vld [vmem:[%s8] sm:$0x1]
  %v197 = vperm.slane %v195, 0
  %v201 = vunpack.c.l.b16 %v193
  %v202 = vunpack.c.l.b16 %v194
  %v203 = vpack.c.b16 %v202, %v201
  %v206 = vsel %vm107, %v192, 0
  %208 = vmatpush.bf16.msra.mxu0 0
  %209 = vmatpush.bf16.msra.mxu0 0
  %210 = vmatpush.bf16.msra.mxu0 0
  %211 = vmatpush.bf16.msra.mxu0 0
  %212 = vmatpush.bf16.msra.mxu0 0
  %213 = vmatpush.bf16.msra.mxu0 0
  %214 = vmatpush.bf16.msra.mxu0 0
  %215 = vmatpush.bf16.msra.mxu0 %v203
  %216 = vmatmul.bf16.gmra.mxu0 %v206
  %v217 = vpop.f32.mrf.mxu0
  %v218 = vadd.f32 %v197, %v217
  %v219 = vpop.f32.mrf.mxu0
  %v220 = vadd.f32 %v197, %v219
  %221 = vdwg.mxu0
  %v222 = vmax.f32 %v218, 0.0
  %v223 = vmax.f32 %v220, 0.0
  %v224 = vld [vmem:[%s9] sm:$0x1]
  %v226 = vperm.slane %v224, 0
  %v228 = vadd.f32 %v163, %v226
  %v229 = vadd.f32 %v165, %v226
  %v230 = vadd.f32 %v222, %v228
  %v231 = vadd.f32 %v223, %v229
  %v232 = vmax.f32 %v230, 0.0
  %v233 = vmax.f32 %v231, 0.0
  %v234 = vrot.slane %v232, 6
  %v235 = vrot.slane %v233, 6
  %vm236 = vcmp.lt.s32.totalorder %v83, 2
  %v237 = vsel %vm236, %v234, %v235
  %v238 = vsel %vm236, %v235, %v234
  %240 = vset.pattern.permute.xlu0 0
  %241 = vperm.xlu0 %240, %v74
  %v242 = vpop.permute.xlu0 %241
  %245 = vset.pattern.permute.xlu0 0
  %246 = vperm.xlu0 %245, %v75
  %v247 = vpop.permute.xlu0 %246
  %v249 = vmul.f32 %v238, %v242
  %v250 = vmul.f32 %v237, %v247
  %253 = vrot.lane.b32.xlu0 %v232, 8
  %v254 = vpop.permute.xlu0 %253
  %255 = vrot.lane.b32.xlu0 %v233, 8
  %v256 = vpop.permute.xlu0 %255
  %v259 = vsel %vm189, %v249, %v254
  %v260 = vsel %vm189, %v250, %v256
  %v261 = vpack.c.bf16 %v260, %v259
  %v262 = vld [vmem:[%s10] sm:$0xff]
  %v263 = vld [vmem:[%s10 + $0x8] sm:$0xff]
  %v266 = vunpack.c.l.b16 %v262
  %v267 = vunpack.c.h.b16 %v262
  %v268 = vunpack.c.l.b16 %v263
  %v269 = vunpack.c.h.b16 %v263
  %v270 = vpack.c.b16 %v268, %v266
  %v271 = vpack.c.b16 %v269, %v267
  %v275 = vsel %vm107, %v261, 0
  %277 = vmatpush.bf16.msra.mxu0 0
  %278 = vmatpush.bf16.msra.mxu0 0
  %279 = vmatpush.bf16.msra.mxu0 0
  %280 = vmatpush.bf16.msra.mxu0 0
  %281 = vmatpush.bf16.msra.mxu0 0
  %282 = vmatpush.bf16.msra.mxu0 0
  %283 = vmatpush.bf16.msra.mxu0 0
  %284 = vmatpush.bf16.msra.mxu0 %v270
  %285 = vmatmul.bf16.gmra.mxu0 %v275
  %v286 = vpop.f32.mrf.mxu0
  %v287 = vadd.f32 0.0, %v286
  %v288 = vpop.f32.mrf.mxu0
  %v289 = vadd.f32 0.0, %v288
  %290 = vdwg.mxu0
  %291 = vmatpush.bf16.msra.mxu0 0
  %292 = vmatpush.bf16.msra.mxu0 0
  %293 = vmatpush.bf16.msra.mxu0 0
  %294 = vmatpush.bf16.msra.mxu0 0
  %295 = vmatpush.bf16.msra.mxu0 0
  %296 = vmatpush.bf16.msra.mxu0 0
  %297 = vmatpush.bf16.msra.mxu0 0
  %298 = vmatpush.bf16.msra.mxu0 %v271
  %299 = vmatmul.bf16.gmra.mxu0 %v275
  %v300 = vpop.f32.mrf.mxu0
  %v301 = vadd.f32 0.0, %v300
  %v302 = vpop.f32.mrf.mxu0
  %v303 = vadd.f32 0.0, %v302
  %304 = vdwg.mxu0
  %v305 = vld [vmem:[%s11] sm:$0x1]
  %v307 = vperm.slane %v305, 0
  %v309 = vadd.f32 %v287, %v307
  %v310 = vadd.f32 %v289, %v307
  %v311 = vmax.f32 %v309, 0.0
  %v312 = vmax.f32 %v310, 0.0
  %v313 = vrot.slane %v311, 6
  %v314 = vrot.slane %v312, 6
  %v315 = vsel %vm236, %v313, %v314
  %v316 = vsel %vm236, %v314, %v313
  %v317 = vmul.f32 %v316, %v242
  %v318 = vmul.f32 %v315, %v247
  %321 = vrot.lane.b32.xlu0 %v311, 4
  %v322 = vpop.permute.xlu0 %321
  %323 = vrot.lane.b32.xlu0 %v312, 4
  %v324 = vpop.permute.xlu0 %323
  %vm327 = vcmask 31744
  %v328 = vsel %vm327, %v317, %v322
  %v329 = vsel %vm327, %v318, %v324
  %v330 = vpack.c.bf16 %v329, %v328
  %v331 = vld [vmem:[%s12] sm:$0xf]
  %v332 = vld [vmem:[%s13] sm:$0x1]
  %v334 = vperm.slane %v332, 0
  %v337 = vsel %vm189, %v330, 0
  %vm339 = vcmask 1043456
  %v341 = vsel %vm339, %v331, 0
  %343 = vmatpush.bf16.msra.mxu0 0
  %344 = vmatpush.bf16.msra.mxu0 0
  %345 = vmatpush.bf16.msra.mxu0 0
  %346 = vmatpush.bf16.msra.mxu0 0
  %347 = vmatpush.bf16.msra.mxu0 0
  %348 = vmatpush.bf16.msra.mxu0 0
  %349 = vmatpush.bf16.msra.mxu0 0
  %350 = vmatpush.bf16.msra.mxu0 %v341
  %351 = vmatmul.bf16.gmra.mxu0 %v337
  %v352 = vpop.f32.mrf.mxu0
  %v353 = vadd.f32 %v334, %v352
  %v354 = vpop.f32.mrf.mxu0
  %v355 = vadd.f32 %v334, %v354
  %356 = vdwg.mxu0
  %v357 = vmax.f32 %v353, 0.0
  %v358 = vmax.f32 %v355, 0.0
  %v359 = vld [vmem:[%s14] sm:$0x1]
  %v361 = vperm.slane %v359, 0
  %v363 = vadd.f32 %v301, %v361
  %v364 = vadd.f32 %v303, %v361
  %v365 = vadd.f32 %v357, %v363
  %v366 = vadd.f32 %v358, %v364
  %v367 = vmax.f32 %v365, 0.0
  %v368 = vmax.f32 %v366, 0.0
  %v369 = vrot.slane %v367, 4
  %v370 = vrot.slane %v368, 4
  %vm371 = vcmp.lt.s32.totalorder %v83, 4
  %v372 = vsel %vm371, %v369, %v370
  %v373 = vsel %vm371, %v370, %v369
  %375 = vset.pattern.permute.xlu0 0
  %376 = vperm.xlu0 %375, %v76
  %v377 = vpop.permute.xlu0 %376
  %380 = vset.pattern.permute.xlu0 0
  %381 = vperm.xlu0 %380, %v77
  %v382 = vpop.permute.xlu0 %381
  %v384 = vmul.f32 %v373, %v377
  %v385 = vmul.f32 %v372, %v382
  %388 = vrot.lane.b32.xlu0 %v367, 4
  %v389 = vpop.permute.xlu0 %388
  %390 = vrot.lane.b32.xlu0 %v368, 4
  %v391 = vpop.permute.xlu0 %390
  %v394 = vsel %vm327, %v384, %v389
  %v395 = vsel %vm327, %v385, %v391
  %v396 = vpack.c.bf16 %v395, %v394
  %v397 = vld [vmem:[%s15] sm:$0xff]
  %v399 = vunpack.c.l.b16 %v397
  %v400 = vunpack.c.h.b16 %v397
  %v401 = vpack.c.b16 %v399, %v399
  %v402 = vpack.c.b16 %v400, %v400
  %v404 = vsel %vm189, %v396, 0
  %v407 = vsel %vm339, %v401, 0
  %v410 = vsel %vm339, %v402, 0
  %412 = vmatpush.bf16.msra.mxu0 0
  %413 = vmatpush.bf16.msra.mxu0 0
  %414 = vmatpush.bf16.msra.mxu0 0
  %415 = vmatpush.bf16.msra.mxu0 0
  %416 = vmatpush.bf16.msra.mxu0 0
  %417 = vmatpush.bf16.msra.mxu0 0
  %418 = vmatpush.bf16.msra.mxu0 0
  %419 = vmatpush.bf16.msra.mxu0 %v407
  %420 = vmatmul.bf16.gmra.mxu0 %v404
  %v421 = vpop.f32.mrf.mxu0
  %v422 = vadd.f32 0.0, %v421
  %v423 = vpop.f32.mrf.mxu0
  %v424 = vadd.f32 0.0, %v423
  %425 = vdwg.mxu0
  %426 = vmatpush.bf16.msra.mxu0 0
  %427 = vmatpush.bf16.msra.mxu0 0
  %428 = vmatpush.bf16.msra.mxu0 0
  %429 = vmatpush.bf16.msra.mxu0 0
  %430 = vmatpush.bf16.msra.mxu0 0
  %431 = vmatpush.bf16.msra.mxu0 0
  %432 = vmatpush.bf16.msra.mxu0 0
  %433 = vmatpush.bf16.msra.mxu0 %v410
  %434 = vmatmul.bf16.gmra.mxu0 %v404
  %v435 = vpop.f32.mrf.mxu0
  %v436 = vadd.f32 0.0, %v435
  %v437 = vpop.f32.mrf.mxu0
  %v438 = vadd.f32 0.0, %v437
  %439 = vdwg.mxu0
  %v440 = vld [vmem:[#allocation2] sm:$0x1]
  %v442 = vperm.slane %v440, 0
  %v444 = vadd.f32 %v422, %v442
  %v445 = vadd.f32 %v424, %v442
  %v446 = vmax.f32 %v444, 0.0
  %v447 = vmax.f32 %v445, 0.0
  %v448 = vrot.slane %v446, 4
  %v449 = vrot.slane %v447, 4
  %v450 = vsel %vm371, %v448, %v449
  %v451 = vsel %vm371, %v449, %v448
  %v452 = vmul.f32 %v451, %v76
  %v453 = vmul.f32 %v450, %v77
  %456 = vrot.lane.b32.xlu0 %v446, 1
  %v457 = vpop.permute.xlu0 %456
  %458 = vrot.lane.b32.xlu0 %v447, 1
  %v459 = vpop.permute.xlu0 %458
  %vm462 = vcmask 7168
  %v463 = vsel %vm462, %v452, %v457
  %v464 = vsel %vm462, %v453, %v459
  %v465 = vpack.c.bf16 %v464, %v463
  %v466 = vld [vmem:[%s17] sm:$0x1]
  %v467 = vld [vmem:[#allocation3] sm:$0x1]
  %v469 = vperm.slane %v467, 0
  %vm471 = vcmask 15360
  %v473 = vsel %vm471, %v465, 0
  %vm475 = vcmask 1040384
  %v477 = vsel %vm475, %v466, 0
  %479 = vmatpush.bf16.msra.mxu0 0
  %480 = vmatpush.bf16.msra.mxu0 0
  %481 = vmatpush.bf16.msra.mxu0 0
  %482 = vmatpush.bf16.msra.mxu0 0
  %483 = vmatpush.bf16.msra.mxu0 0
  %484 = vmatpush.bf16.msra.mxu0 0
  %485 = vmatpush.bf16.msra.mxu0 0
  %486 = vmatpush.bf16.msra.mxu0 %v477
  %487 = vmatmul.bf16.gmra.mxu0 %v473
  %v488 = vpop.f32.mrf.mxu0
  %v489 = vadd.f32 %v469, %v488
  %v490 = vpop.f32.mrf.mxu0
  %v491 = vadd.f32 %v469, %v490
  %492 = vdwg.mxu0
  %v493 = vmax.f32 %v489, 0.0
  %v494 = vmax.f32 %v491, 0.0
  %v495 = vld [vmem:[#allocation4] sm:$0x1]
  %v497 = vperm.slane %v495, 0
  %v499 = vadd.f32 %v436, %v497
  %v500 = vadd.f32 %v438, %v497
  %v501 = vadd.f32 %v493, %v499
  %v502 = vadd.f32 %v494, %v500
  %v503 = vmax.f32 %v501, 0.0
  %v504 = vmax.f32 %v502, 0.0
  %v505 = vld [vmem:[%s4] sm:$0x3]
  %v507 = vsel %vm107, %v505, 0
  %509 = vmatpush.msra.mxu0 0.0
  %510 = vmatpush.msra.mxu0 0.0
  %511 = vmatpush.msra.mxu0 0.0
  %512 = vmatpush.msra.mxu0 0.0
  %513 = vmatpush.msra.mxu0 0.0
  %514 = vmatpush.msra.mxu0 0.0
  %515 = vmatpush.msra.mxu0 0.0
  %516 = vmatpush.msra.mxu0 0.0
  %517 = vmatpush.msra.mxu0 0.0
  %518 = vmatpush.msra.mxu0 0.0
  %519 = vmatpush.msra.mxu0 0.0
  %520 = vmatpush.msra.mxu0 0.0
  %521 = vmatpush.msra.mxu0 0.0
  %522 = vmatpush.msra.mxu0 0.0
  %523 = vmatpush.msra.mxu0 %v504
  %524 = vmatpush.msra.mxu0 %v503
  %525 = vmatmul.f32.gmra.mxu0 %v507
  %v526 = vpop.f32.mrf.mxu0
  %v527 = vadd.f32 0.0, %v526
  %528 = vdwg.mxu0
  %vm529 = vcmask 1024
  %530 = vst.msk [vmem:[%s20] sm:$0x3] %vm529, %v527
  // Predicated region
  $region82: #{fwd.1} parent=0 // pred_check
    _
  $region83: #{fwd.1} parent=0 // pred_check_branch
    %532 = sbr.rel (0) target = $region85
  $region84: #{fwd.1} parent=0 // pred_region
    _
  $region85: #{fwd.1} parent=0 // pred_fallthru
    _
  // Predicated region
  $region86: #{fwd.1} parent=0 // pred_check
    _
  $region87: #{fwd.1} parent=0 // pred_check_branch
    %534 = sbr.rel (0) target = $region89
  $region88: #{fwd.1} parent=0 // pred_region
    _
  $region89: #{fwd.1} parent=0 // pred_fallthru
    _

</llo_original>
